<compile_context>
chip_gen: v7x
topology: tpu7x:2x2x1
jax: 0.10.0
libtpu: 0.0.40
codegen_flags: <defaults>
</compile_context>

<pallas_src>
from functools import partial

import jax
import jax.numpy as jnp
from jax import lax
from jax.experimental import pallas as pl
from jax.experimental.pallas import tpu as pltpu


# ----------------------------------------------------------------------------
# Pass 2: fused EncoderLayer forward for one batch tile
# ----------------------------------------------------------------------------
def _encoder_layer_kernel(x_ref, h_ref, pc_ref, tbl_ref, scal_ref, o_ref, *,
                          eup_bf16):
    # x_ref   : (TB, Lp) f32   LLR input (trailing 1 squeezed, L lane-padded)
    # h_ref   : (TB, p)  bf16  syndrome / initial state (+-1 -> exact in bf16)
    # pc_ref  : (p, Lp)  bf16  pc_matrix, MXU (K, N) orientation (0/1 -> exact)
    # tbl_ref : (4, Lp)  f32   [Sb@pc, Sc@pc, colsum(pc), softmax lane mask]
    # scal_ref: (3,) SMEM f32  [1/max|h@pc| (global), out bias, 2*sum(W_out)]
    # o_ref   : (TB, Lp) f32   softmax over the valid L lanes (torch dim=-2)
    x = x_ref[...]
    h = h_ref[...]
    pc = pc_ref[...]
    tbl = tbl_ref[...]
    wbpc, wcpc = tbl[0:1, :], tbl[1:2, :]
    colsum, lane_mask = tbl[2:3, :], tbl[3:4, :]
    inv_max = scal_ref[0]
    bias_out = scal_ref[1]
    two_wsum = scal_ref[2]

    # Bbias = h @ pc on the MXU, natural (M,K)x(K,N), f32 accumulation (exact).
    bbias = jnp.dot(h, pc, preferred_element_type=jnp.float32)       # (TB, Lp)

    # has_errors = any(h != 1) per row: cheap cross-lane reduce.
    hf = h.astype(jnp.float32)
    has_err = jnp.max(jnp.abs(hf - 1.0), axis=1, keepdims=True) > 0.0
    gate = jnp.where(has_err, two_wsum, 0.0)                         # (TB, 1)

    # B / C coefficients; transcendentals optionally in bf16 (v6e/v7x EUP).
    tdt = jnp.bfloat16 if eup_bf16 else jnp.float32
    absx = jnp.abs(x)
    tanh_b = jnp.tanh((absx * wbpc).astype(tdt)).astype(jnp.float32)
    tanh_c = jnp.tanh((absx * wcpc).astype(tdt)).astype(jnp.float32)
    b_coef = bbias * inv_max + tanh_b
    c_coef = 0.5 + tanh_c

    # Collapsed scan + resize_output; padded lanes are pushed to -1e30.
    resized = (b_coef * c_coef) * (colsum * gate) + bias_out + lane_mask

    # softmax over L; max/sum/normalise stay f32, divide -> reciprocal-mul.
    m = jnp.max(resized, axis=1, keepdims=True)
    e = jnp.exp((resized - m).astype(tdt)).astype(jnp.float32)
    denom = jnp.sum(e, axis=1, keepdims=True)
    o_ref[...] = e * pl.reciprocal(denom, approx=eup_bf16)


# ----------------------------------------------------------------------------
# Pass 1: global max|h @ pc| (output-resident (1,1) accumulator over the grid)
# ----------------------------------------------------------------------------
def _make_bbias_max_kernel(tb, batch):
    ragged = (batch % tb) != 0

    def kernel(h_ref, pc_ref, o_ref):
        @pl.when(pl.program_id(0) == 0)
        def _init():
            o_ref[...] = jnp.zeros_like(o_ref)

        bb = jnp.abs(jnp.dot(h_ref[...], pc_ref[...],
                             preferred_element_type=jnp.float32))    # (TB, Lp)
        if ragged:
            # Mask garbage rows of the ragged last batch block.
            row = (pl.program_id(0) * tb
                   + lax.broadcasted_iota(jnp.int32, (bb.shape[0], 1), 0))
            bb = jnp.where(row < batch, bb, 0.0)
        tile_max = jnp.max(jnp.max(bb, axis=1, keepdims=True),
                           axis=0, keepdims=True)                    # (1, 1)
        o_ref[...] = jnp.maximum(o_ref[...], tile_max)

    return kernel


# ----------------------------------------------------------------------------
# Tiling / generation heuristics
# ----------------------------------------------------------------------------
def _default_eup_bf16():
    # bf16 transcendentals only where the EUP supports bf16 (v6e / v7x).
    try:
        kind = jax.devices()[0].device_kind.lower()
    except Exception:
        return False
    return any(tag in kind for tag in ("v6", "v7", "tpu7"))


def _pick_batch_tile(batch, lp):
    # Batch rows per grid step.
    if batch <= 8:
        return batch                     # full-dim block (legal for any size)
    # (a) keep the double-buffered f32 x + out streams under ~12 MiB so the
    #     working set is comfortable even on v7x's 64 MiB VMEM.
    cap_vmem = max(8, ((12 * 1024 * 1024) // (16 * lp)) // 8 * 8)
    # (b) at least two grid steps so both v7x TensorCores get work.
    cap_split = max(8, (((batch + 1) // 2) + 7) // 8 * 8)
    return min(512, cap_vmem, cap_split)


# ----------------------------------------------------------------------------
# Wrapper
# ----------------------------------------------------------------------------
@partial(jax.jit, static_argnames=("eup_bf16",))
def encoder_layer_forward(x3, h, pc, wb, wc, wout, bout, *, eup_bf16=False):
    # x3: (B, L, 1)  h: (B, p)  pc: (p, L) in {0,1}  wb/wc/wout: (1, p)  bout: (1,)
    x = x3[..., 0].astype(jnp.float32)
    B, L = x.shape
    p = pc.shape[0]
    Lp = ((L + 127) // 128) * 128        # lane-dense output / padded softmax

    # ---- batch-independent precompute (tiny; off the per-tile path) --------
    # Contract: pc must be exactly binary; the scan collapse relies on it.
    pcf = pc.astype(jnp.float32)
    wbpc = (wb.astype(jnp.float32) @ pcf).reshape((L,))              # Sb @ pc
    wcpc = (wc.astype(jnp.float32) @ pcf).reshape((L,))              # Sc @ pc
    colsum = jnp.sum(pcf, axis=0)                                    # popcount
    table = jnp.zeros((4, Lp), jnp.float32)
    table = table.at[0, :L].set(wbpc)
    table = table.at[1, :L].set(wcpc)
    table = table.at[2, :L].set(colsum)
    table = table.at[3, L:].set(-1e30)   # additive mask: padded lanes -> exp 0

    pc_bf = jnp.zeros((p, Lp), jnp.bfloat16).at[:, :L].set(
        pcf.astype(jnp.bfloat16))        # MXU-natural (K, N), lane dense
    h_bf = h.astype(jnp.bfloat16)        # +-1 syndrome -> exact in bf16
    if Lp != L:
        x = jnp.pad(x, ((0, 0), (0, Lp - L)))
    # TODO(synk): on v5e a bf16 x / bf16 output stream would roughly halve HBM
    # traffic (mem-bound there); kept f32 to preserve reference tolerances.

    TB = _pick_batch_tile(B, Lp)
    grid = (pl.cdiv(B, TB),)             # no batch padding: ragged block is masked

    # ---- pass 1: global max|h @ pc| (couples the whole batch) --------------
    bbmax = pl.pallas_call(
        _make_bbias_max_kernel(TB, B),
        out_shape=jax.ShapeDtypeStruct((1, 1), jnp.float32),
        grid=grid,
        in_specs=[pl.BlockSpec((TB, p), lambda i: (i, 0)),
                  pl.BlockSpec((p, Lp), lambda i: (0, 0))],
        out_specs=pl.BlockSpec((1, 1), lambda i: (0, 0)),
        compiler_params=pltpu.CompilerParams(
            dimension_semantics=("arbitrary",)),
    )(h_bf, pc_bf)

    # 1e-30 guard: the torch reference yields NaN when h@pc == 0 everywhere.
    inv_max = 1.0 / jnp.maximum(bbmax[0, 0], 1e-30)
    scalars = jnp.stack(
        [inv_max, bout.reshape(()),
         2.0 * jnp.sum(wout.astype(jnp.float32))]).astype(jnp.float32)

    # ---- pass 2: fused forward ----------------------------------------------
    out = pl.pallas_call(
        partial(_encoder_layer_kernel, eup_bf16=eup_bf16),
        out_shape=jax.ShapeDtypeStruct((B, Lp), jnp.float32),
        grid=grid,
        in_specs=[
            pl.BlockSpec((TB, Lp), lambda i: (i, 0)),                # x
            pl.BlockSpec((TB, p), lambda i: (i, 0)),                 # h (bf16)
            pl.BlockSpec((p, Lp), lambda i: (0, 0)),                 # pc (bf16)
            pl.BlockSpec((4, Lp), lambda i: (0, 0)),                 # table
            pl.BlockSpec(memory_space=pltpu.MemorySpace.SMEM),       # scalars
        ],
        out_specs=pl.BlockSpec((TB, Lp), lambda i: (i, 0)),
        compiler_params=pltpu.CompilerParams(
            dimension_semantics=("parallel",)),
    )(x, h_bf, pc_bf, table, scalars)

    return out[:, :L, None]              # (B, L, 1), matches the torch output


# ----------------------------------------------------------------------------
# Plain-JAX reference (literal translation of the torch forward) for checking
# ----------------------------------------------------------------------------
def reference_forward(x3, h0, pc, wb, wc, wout, bout):
    Xe = x3 * pc.T[None]                                             # embed
    has_err = jnp.any(h0 != 1.0, axis=-1, keepdims=True)[..., None]

    def ssm(Xp, pcp, h):
        bbias = (h @ pcp)[..., None]
        bcoef = bbias / jnp.max(jnp.abs(bbias)) + jnp.tanh(jnp.abs(Xp) @ wb.T)
        ccoef = 0.5 + jnp.tanh(jnp.abs(Xp) @ wc.T)
        L = Xp.shape[1]
        p = pcp.shape[0]
        h_cur = h
        ys = []
        for i in range(L):
            col = pcp[:, i]
            h_cur = h_cur + (-1.0) * col * h_cur + bcoef[:, i, :] * col
            yval = ccoef[:, i, :] * (h_cur @ col)[:, None]
            ys.append(jnp.broadcast_to(yval, (h.shape[0], p)))
        y = jnp.stack(ys, axis=1)
        return y * has_err.astype(y.dtype)

    y1 = ssm(Xe, pc, h0)
    y2 = jnp.flip(ssm(jnp.flip(Xe, 1), jnp.flip(pc, 1), h0), 1)
    out = y1 + y2
    out_resized = out @ wout.T + bout
    return jax.nn.softmax(out_resized, axis=-2)


# ----------------------------------------------------------------------------
if __name__ == "__main__":
    key = jax.random.PRNGKey(0)
    k_pc, k_x, k_wb, k_wc, k_wo, k_bo = jax.random.split(key, 6)

    Bb, L, p = 2, 16, 8          # batch, seq_len (code.n), d_model (pc rows)

    pc = (jax.random.uniform(k_pc, (p, L)) < 0.5).astype(jnp.float32)
    x3 = jax.random.normal(k_x, (Bb, L, 1), jnp.float32)

    # TODO(synk): get_syndrome() is external to the snippet; use the standard
    # bipolar syndrome (product of bit signs per check) and feed h explicitly.
    signs = jnp.sign(x3[..., 0])                                     # (B, L)
    h = jnp.prod(jnp.where(pc[None] > 0.5, signs[:, None, :], 1.0), axis=-1)

    # deterministic parameter init (xavier-uniform for dim>1 weights)
    xav = (6.0 / (p + 1)) ** 0.5
    wb = jax.random.uniform(k_wb, (1, p), jnp.float32, -xav, xav)    # Sb
    wc = jax.random.uniform(k_wc, (1, p), jnp.float32, -xav, xav)    # Sc
    wout = jax.random.uniform(k_wo, (1, p), jnp.float32, -xav, xav)  # resize W
    bscale = 1.0 / (p ** 0.5)
    bout = jax.random.uniform(k_bo, (1,), jnp.float32, -bscale, bscale)
    # (Sa, norm_output and syndrome_connection exist in __init__ but are
    #  unused in forward.)

    ref = reference_forward(x3, h, pc, wb, wc, wout, bout)

    # Exact path (f32 transcendentals) -- reference-level semantics.
    out = encoder_layer_forward(x3, h, pc, wb, wc, wout, bout, eup_bf16=False)
    jax.block_until_ready(out)
    assert out.shape == (Bb, L, 1), out.shape
    assert bool(jnp.allclose(out, ref, rtol=1e-4, atol=1e-5)), (
        float(jnp.max(jnp.abs(out - ref))))

    # Generation-gated fast path (bf16 EUP on v6e/v7x, f32 elsewhere): smoke
    # test only -- bf16 transcendentals trade ~1e-2 accuracy for EUP rate.
    fast = encoder_layer_forward(x3, h, pc, wb, wc, wout, bout,
                                 eup_bf16=_default_eup_bf16())
    jax.block_until_ready(fast)
    assert bool(jnp.all(jnp.isfinite(fast)))
    assert float(jnp.max(jnp.abs(jnp.sum(fast, axis=1) - 1.0))) < 1e-2
    assert float(jnp.max(jnp.abs(fast - ref))) < 0.35

    print("KERNEL_OK")
</pallas_src>

<mosaic_0001>
module attributes {stable_mosaic.version = 11 : i64} {
  func.func @kernel(%arg0: i32, %arg1: memref<2x8xbf16, #tpu.memory_space<vmem>>, %arg2: memref<8x128xbf16, #tpu.memory_space<vmem>>, %arg3: memref<1x1xf32, #tpu.memory_space<vmem>>) attributes {dimension_semantics = [#tpu.dimension_semantics<arbitrary>], iteration_bounds = array<i64: 1>, scalar_prefetch = 0 : i64, scratch_operands = 0 : i64, tpu.core_type = #tpu.core_type<tc>, window_params = [{transform_indices = @transform_0, window_bounds = array<i64: 2, 8>}, {pipeline_mode = #tpu.pipeline_mode<synchronous>, transform_indices = @transform_1, window_bounds = array<i64: 8, 128>}, {pipeline_mode = #tpu.pipeline_mode<synchronous>, transform_indices = @transform_2, window_bounds = array<i64: 1, 1>}]} {
    %c0_i32 = arith.constant 0 : i32
    %0 = arith.cmpi eq, %arg0, %c0_i32 : i32
    %1 = arith.extui %0 : i1 to i32
    %c0_i32_0 = arith.constant 0 : i32
    %2 = arith.cmpi ne, %1, %c0_i32_0 : i32
    scf.if %2 {
      %cst_10 = arith.constant 0.000000e+00 : f32
      %14 = vector.broadcast %cst_10 : f32 to vector<1x1xf32>
      %c0_11 = arith.constant 0 : index
      %c0_12 = arith.constant 0 : index
      %15 = vector.load %arg3[%c0_11, %c0_12] : memref<1x1xf32, #tpu.memory_space<vmem>>, vector<1x1xf32>
      tpu.vector_store %arg3[%c0_11, %c0_12], %14 {strides = array<i32>} : memref<1x1xf32, #tpu.memory_space<vmem>>, vector<1x1xf32>,
    } else {
    }
    %c0 = arith.constant 0 : index
    %c0_1 = arith.constant 0 : index
    %3 = vector.load %arg1[%c0, %c0_1] : memref<2x8xbf16, #tpu.memory_space<vmem>>, vector<2x8xbf16>
    %c0_2 = arith.constant 0 : index
    %c0_3 = arith.constant 0 : index
    %4 = vector.load %arg2[%c0_2, %c0_3] : memref<8x128xbf16, #tpu.memory_space<vmem>>, vector<8x128xbf16>
    %cst = arith.constant dense<0.000000e+00> : vector<2x128xf32>
    %5 = tpu.matmul %3, %4, %cst {dimension_numbers = #tpu.dot_dimension_numbers<[1], [0], [0], [1], [0, 0, 1, 1], [], []>} : vector<2x8xbf16>, vector<8x128xbf16>, vector<2x128xf32> -> vector<2x128xf32>
    %6 = math.absf %5 : vector<2x128xf32>
    %cst_4 = arith.constant dense<0xFF800000> : vector<2xf32>
    %7 = vector.multi_reduction <maximumf>, %6, %cst_4 [1] : vector<2x128xf32> to vector<2xf32>
    %8 = vector.shape_cast %7 : vector<2xf32> to vector<2x1xf32>
    %cst_5 = arith.constant dense<0xFF800000> : vector<1xf32>
    %9 = vector.multi_reduction <maximumf>, %8, %cst_5 [0] : vector<2x1xf32> to vector<1xf32>
    %10 = vector.shape_cast %9 : vector<1xf32> to vector<1x1xf32>
    %c0_6 = arith.constant 0 : index
    %c0_7 = arith.constant 0 : index
    %11 = vector.load %arg3[%c0_6, %c0_7] : memref<1x1xf32, #tpu.memory_space<vmem>>, vector<1x1xf32>
    %12 = arith.maximumf %11, %10 : vector<1x1xf32>
    %c0_8 = arith.constant 0 : index
    %c0_9 = arith.constant 0 : index
    %13 = vector.load %arg3[%c0_8, %c0_9] : memref<1x1xf32, #tpu.memory_space<vmem>>, vector<1x1xf32>
    tpu.vector_store %arg3[%c0_8, %c0_9], %12 {strides = array<i32>} : memref<1x1xf32, #tpu.memory_space<vmem>>, vector<1x1xf32>,
    return
  }
  func.func @transform_0(%arg0: i32) -> (i32, i32) {
    %c0_i32 = arith.constant 0 : i32
    %c0_i32_0 = arith.constant 0 : i32
    return %arg0, %c0_i32 : i32, i32
  }
  func.func @transform_1(%arg0: i32) -> (i32, i32) {
    %c0_i32 = arith.constant 0 : i32
    %c0_i32_0 = arith.constant 0 : i32
    %c0_i32_1 = arith.constant 0 : i32
    return %c0_i32, %c0_i32_0 : i32, i32
  }
  func.func @transform_2(%arg0: i32) -> (i32, i32) {
    %c0_i32 = arith.constant 0 : i32
    %c0_i32_0 = arith.constant 0 : i32
    %c0_i32_1 = arith.constant 0 : i32
    return %c0_i32, %c0_i32_0 : i32, i32
  }
}

module attributes {stable_mosaic.version = 11 : i64} {
  func.func @_encoder_layer_kernel(%arg0: i32, %arg1: memref<2x128xf32, #tpu.memory_space<vmem>>, %arg2: memref<2x8xbf16, #tpu.memory_space<vmem>>, %arg3: memref<8x128xbf16, #tpu.memory_space<vmem>>, %arg4: memref<4x128xf32, #tpu.memory_space<vmem>>, %arg5: memref<3xf32, #tpu.memory_space<smem>>, %arg6: memref<2x128xf32, #tpu.memory_space<vmem>>) attributes {dimension_semantics = [#tpu.dimension_semantics<parallel>], iteration_bounds = array<i64: 1>, scalar_prefetch = 0 : i64, scratch_operands = 0 : i64, tpu.core_type = #tpu.core_type<tc>, window_params = [{transform_indices = @transform_0, window_bounds = array<i64: 2, 128>}, {transform_indices = @transform_1, window_bounds = array<i64: 2, 8>}, {pipeline_mode = #tpu.pipeline_mode<synchronous>, transform_indices = @transform_2, window_bounds = array<i64: 8, 128>}, {pipeline_mode = #tpu.pipeline_mode<synchronous>, transform_indices = @transform_3, window_bounds = array<i64: 4, 128>}, {transform_indices = @transform_4, window_bounds = array<i64: 3>}, {transform_indices = @transform_5, window_bounds = array<i64: 2, 128>}]} {
    %c0 = arith.constant 0 : index
    %c0_0 = arith.constant 0 : index
    %0 = vector.load %arg1[%c0, %c0_0] : memref<2x128xf32, #tpu.memory_space<vmem>>, vector<2x128xf32>
    %c0_1 = arith.constant 0 : index
    %c0_2 = arith.constant 0 : index
    %1 = vector.load %arg2[%c0_1, %c0_2] : memref<2x8xbf16, #tpu.memory_space<vmem>>, vector<2x8xbf16>
    %c0_3 = arith.constant 0 : index
    %c0_4 = arith.constant 0 : index
    %2 = vector.load %arg3[%c0_3, %c0_4] : memref<8x128xbf16, #tpu.memory_space<vmem>>, vector<8x128xbf16>
    %c0_5 = arith.constant 0 : index
    %c0_6 = arith.constant 0 : index
    %3 = vector.load %arg4[%c0_5, %c0_6] : memref<4x128xf32, #tpu.memory_space<vmem>>, vector<4x128xf32>
    %4 = vector.extract_strided_slice %3 {offsets = [0, 0], sizes = [1, 128], strides = [1, 1]} : vector<4x128xf32> to vector<1x128xf32>
    %5 = vector.extract_strided_slice %3 {offsets = [1, 0], sizes = [1, 128], strides = [1, 1]} : vector<4x128xf32> to vector<1x128xf32>
    %6 = vector.extract_strided_slice %3 {offsets = [2, 0], sizes = [1, 128], strides = [1, 1]} : vector<4x128xf32> to vector<1x128xf32>
    %7 = vector.extract_strided_slice %3 {offsets = [3, 0], sizes = [1, 128], strides = [1, 1]} : vector<4x128xf32> to vector<1x128xf32>
    %c0_7 = arith.constant 0 : index
    %8 = memref.load %arg5[%c0_7] : memref<3xf32, #tpu.memory_space<smem>>
    %c1 = arith.constant 1 : index
    %9 = memref.load %arg5[%c1] : memref<3xf32, #tpu.memory_space<smem>>
    %c2 = arith.constant 2 : index
    %10 = memref.load %arg5[%c2] : memref<3xf32, #tpu.memory_space<smem>>
    %cst = arith.constant dense<0.000000e+00> : vector<2x128xf32>
    %11 = tpu.matmul %1, %2, %cst {dimension_numbers = #tpu.dot_dimension_numbers<[1], [0], [0], [1], [0, 0, 1, 1], [], []>} : vector<2x8xbf16>, vector<8x128xbf16>, vector<2x128xf32> -> vector<2x128xf32>
    %12 = arith.extf %1 : vector<2x8xbf16> to vector<2x8xf32>
    %cst_8 = arith.constant 1.000000e+00 : f32
    %13 = vector.broadcast %cst_8 : f32 to vector<2x8xf32>
    %14 = arith.subf %12, %13 : vector<2x8xf32>
    %15 = math.absf %14 : vector<2x8xf32>
    %cst_9 = arith.constant dense<0xFF800000> : vector<2xf32>
    %16 = vector.multi_reduction <maximumf>, %15, %cst_9 [1] : vector<2x8xf32> to vector<2xf32>
    %17 = vector.shape_cast %16 : vector<2xf32> to vector<2x1xf32>
    %cst_10 = arith.constant 0.000000e+00 : f32
    %18 = vector.broadcast %cst_10 : f32 to vector<2x1xf32>
    %19 = arith.cmpf ogt, %17, %18 : vector<2x1xf32>
    %cst_11 = arith.constant 0.000000e+00 : f32
    %20 = vector.broadcast %10 : f32 to vector<2x1xf32>
    %21 = vector.broadcast %cst_11 : f32 to vector<2x1xf32>
    %22 = arith.select %19, %20, %21 : vector<2x1xi1>, vector<2x1xf32>
    %23 = math.absf %0 : vector<2x128xf32>
    %24 = vector.broadcast %4 : vector<1x128xf32> to vector<2x128xf32>
    %25 = arith.mulf %23, %24 : vector<2x128xf32>
    %26 = math.tanh %25 : vector<2x128xf32>
    %27 = vector.broadcast %5 : vector<1x128xf32> to vector<2x128xf32>
    %28 = arith.mulf %23, %27 : vector<2x128xf32>
    %29 = math.tanh %28 : vector<2x128xf32>
    %30 = vector.broadcast %8 : f32 to vector<2x128xf32>
    %31 = arith.mulf %11, %30 : vector<2x128xf32>
    %32 = arith.addf %31, %26 : vector<2x128xf32>
    %cst_12 = arith.constant 5.000000e-01 : f32
    %33 = vector.broadcast %cst_12 : f32 to vector<2x128xf32>
    %34 = arith.addf %33, %29 : vector<2x128xf32>
    %35 = arith.mulf %32, %34 : vector<2x128xf32>
    %36 = vector.broadcast %6 : vector<1x128xf32> to vector<2x128xf32>
    %37 = vector.broadcast %22 : vector<2x1xf32> to vector<2x128xf32>
    %38 = arith.mulf %36, %37 : vector<2x128xf32>
    %39 = arith.mulf %35, %38 : vector<2x128xf32>
    %40 = vector.broadcast %9 : f32 to vector<2x128xf32>
    %41 = arith.addf %39, %40 : vector<2x128xf32>
    %42 = vector.broadcast %7 : vector<1x128xf32> to vector<2x128xf32>
    %43 = arith.addf %41, %42 : vector<2x128xf32>
    %cst_13 = arith.constant dense<0xFF800000> : vector<2xf32>
    %44 = vector.multi_reduction <maximumf>, %43, %cst_13 [1] : vector<2x128xf32> to vector<2xf32>
    %45 = vector.shape_cast %44 : vector<2xf32> to vector<2x1xf32>
    %46 = vector.broadcast %45 : vector<2x1xf32> to vector<2x128xf32>
    %47 = arith.subf %43, %46 : vector<2x128xf32>
    %48 = math.exp %47 : vector<2x128xf32>
    %cst_14 = arith.constant dense<0.000000e+00> : vector<2xf32>
    %49 = vector.multi_reduction <add>, %48, %cst_14 [1] : vector<2x128xf32> to vector<2xf32>
    %50 = vector.shape_cast %49 : vector<2xf32> to vector<2x1xf32>
    %51 = tpu.reciprocal %50 : vector<2x1xf32> -> vector<2x1xf32>
    %52 = vector.broadcast %51 : vector<2x1xf32> to vector<2x128xf32>
    %53 = arith.mulf %48, %52 : vector<2x128xf32>
    %c0_15 = arith.constant 0 : index
    %c0_16 = arith.constant 0 : index
    %54 = vector.load %arg6[%c0_15, %c0_16] : memref<2x128xf32, #tpu.memory_space<vmem>>, vector<2x128xf32>
    tpu.vector_store %arg6[%c0_15, %c0_16], %53 {strides = array<i32>} : memref<2x128xf32, #tpu.memory_space<vmem>>, vector<2x128xf32>,
    return
  }
  func.func @transform_0(%arg0: i32) -> (i32, i32) {
    %c0_i32 = arith.constant 0 : i32
    %c0_i32_0 = arith.constant 0 : i32
    return %arg0, %c0_i32 : i32, i32
  }
  func.func @transform_1(%arg0: i32) -> (i32, i32) {
    %c0_i32 = arith.constant 0 : i32
    %c0_i32_0 = arith.constant 0 : i32
    return %arg0, %c0_i32 : i32, i32
  }
  func.func @transform_2(%arg0: i32) -> (i32, i32) {
    %c0_i32 = arith.constant 0 : i32
    %c0_i32_0 = arith.constant 0 : i32
    %c0_i32_1 = arith.constant 0 : i32
    return %c0_i32, %c0_i32_0 : i32, i32
  }
  func.func @transform_3(%arg0: i32) -> (i32, i32) {
    %c0_i32 = arith.constant 0 : i32
    %c0_i32_0 = arith.constant 0 : i32
    %c0_i32_1 = arith.constant 0 : i32
    return %c0_i32, %c0_i32_0 : i32, i32
  }
  func.func @transform_4(%arg0: i32) -> i32 {
    %c0_i32 = arith.constant 0 : i32
    %c0_i32_0 = arith.constant 0 : i32
    return %c0_i32 : i32
  }
  func.func @transform_5(%arg0: i32) -> (i32, i32) {
    %c0_i32 = arith.constant 0 : i32
    %c0_i32_0 = arith.constant 0 : i32
    return %arg0, %c0_i32 : i32, i32
  }
}

</mosaic_0001>

<llo_original>
// kernel: encoder_layer_forward.2
$region0: #{encoder_layer_forward.2}
  #allocation0 [shape = 'u32[]', space=smem, size = 0x4, offset = 0x4, fixed_abs, tag = 'smem constant byte address 0x4 - core index']
  #allocation1 [shape = 'u32[144,128]{1,0:T(1,128)}', space=vmem, size = 0x12000, scoped, tag = 'internal scratch']
  %s0 = inlined_call_operand.vmem [shape: bf16[2,8], index: 0, kind: input, shape index: {}]
  %s1 = inlined_call_operand.vmem [shape: bf16[8,128], index: 1, kind: input, shape index: {}]
  %s2 = inlined_call_operand.hbm [shape: f32[1,1], index: 2, kind: output, shape index: {}]
  %s3 = sld [smem:[#allocation0]]
  $region22: #{encoder_layer_forward.2} parent=0
    _
  %s5 = ssub.s32 1, %s3
  %s6 = scalar_select 0, %s5, %s3
  $region1: #{encoder_layer_forward.2} parent=0
    #allocation2 [shape = 'u8[512]{0}', space=vmem, size = 0x400, scoped, tag = 'output window, operand 0, single buffered']
    #allocation3 [shape = 's32[1]{0}', space=sflag, size = 0x4, scoped, tag = 'scoped memory for encoder_layer_forward.2']
    %7 = vsyncpa [#allocation3], 0
    // Predicated region
    $region2: #{encoder_layer_forward.2} parent=1 // pred_check
      _
    $region3: #{encoder_layer_forward.2} parent=1 // pred_check_branch
      %9 = sbr.rel (0) target = $region5
    $region4: #{encoder_layer_forward.2} parent=1 // pred_region
      _
    $region5: #{encoder_layer_forward.2} parent=1 // pred_fallthru
      _
    // Predicated region
    $region6: #{encoder_layer_forward.2} parent=1 // pred_check
      _
    $region7: #{encoder_layer_forward.2} parent=1 // pred_check_branch
      %11 = sbr.rel (0) target = $region9
    $region8: #{encoder_layer_forward.2} parent=1 // pred_region
      _
    $region9: #{encoder_layer_forward.2} parent=1 // pred_fallthru
      _
    %p13 = scmp.eq.s32.totalorder 0, 0
    // Predicated region
    $region10: #{encoder_layer_forward.2} parent=1 // pred_check
      %p14 = pneg %p13
    $region11: #{encoder_layer_forward.2} parent=1 // pred_check_branch
      %16 = sbr.rel (%p14) target = $region13
    $region12: #{encoder_layer_forward.2} parent=1 // pred_region
      %vm17 = vcmask 0
      %18 = vst.msk [vmem:[#allocation2] sm:$0x1] %vm17, 0.0
    $region13: #{encoder_layer_forward.2} parent=1 // pred_fallthru
      _
    %v19 = vld [vmem:[%s0] sm:$0x1]
    %v20 = vld [vmem:[%s1] sm:$0xf]
    %vm21 = vcmask 64512
    %v23 = vsel %vm21, %v19, 0
    %vm25 = vcmask 1043456
    %v27 = vsel %vm25, %v20, 0
    %29 = vmatprep.subr.bf16.mxu0 0
    %30 = vmatpush1.bf16.msra.mxu0 %v27
    %31 = vmatprep.subr.bf16.mxu0 0
    %32 = vmatpush1.bf16.msra.mxu0 0
    %33 = vmatprep.subr.bf16.mxu0 0
    %34 = vmatpush1.bf16.msra.mxu0 0
    %35 = vmatprep.subr.bf16.mxu0 0
    %36 = vmatpush1.bf16.msra.mxu0 0
    %37 = vmatprep.subr.bf16.mxu0 0
    %38 = vmatpush1.bf16.msra.mxu0 0
    %39 = vmatprep.subr.bf16.mxu0 0
    %40 = vmatpush1.bf16.msra.mxu0 0
    %41 = vmatprep.subr.bf16.mxu0 0
    %42 = vmatpush1.bf16.msra.mxu0 0
    %43 = vmatprep.subr.bf16.mxu0 0
    %44 = vmatpush1.bf16.msra.mxu0 0
    %45 = vmatprep.subr.bf16.mxu0 0
    %46 = vmatpush1.bf16.msra.mxu0 0
    %47 = vmatprep.subr.bf16.mxu0 0
    %48 = vmatpush1.bf16.msra.mxu0 0
    %49 = vmatprep.subr.bf16.mxu0 0
    %50 = vmatpush1.bf16.msra.mxu0 0
    %51 = vmatprep.subr.bf16.mxu0 0
    %52 = vmatpush1.bf16.msra.mxu0 0
    %53 = vmatprep.subr.bf16.mxu0 0
    %54 = vmatpush1.bf16.msra.mxu0 0
    %55 = vmatprep.subr.bf16.mxu0 0
    %56 = vmatpush1.bf16.msra.mxu0 0
    %57 = vmatprep.subr.bf16.mxu0 0
    %58 = vmatpush1.bf16.msra.mxu0 0
    %59 = vmatprep.subr.bf16.mxu0 0
    %60 = vmatpush1.bf16.msra.mxu0 0
    %61 = vmatprep.mubr.bf16.mxu0 0
    %62 = vmatmul.mubr.bf16.gmra.mrb[0].mxu0 %v23
    %v63 = vpop.f32.mrb[0].mxu0
    %v64 = vadd.f32 0.0, %v63
    %v65 = vpop.f32.mrb[0].mxu0
    %v66 = vpop.f32.mrb[0].mxu0
    %v67 = vpop.f32.mrb[0].mxu0
    %68 = vdwg.mxu0
    %v69 = vand.u32 2147483647, %v64
    %vm70 = vcmask 1041408
    %v71 = vsel %vm70, %v69, -inf
    %72 = vmax.xlane.f32.xlu0 %v71
    %v73 = vpop.xlane.xlu0 %72
    %v74 = vsel %vm70, %v73, -inf
    %v75 = vrot.slane %v74, 4
    %v76 = vmax.f32 %v74, %v75
    %v77 = vrot.slane %v76, 2
    %v78 = vmax.f32 %v76, %v77
    %v79 = vrot.slane %v78, 1
    %v80 = vmax.f32 %v78, %v79
    %v81 = vld [vmem:[#allocation2] sm:$0x1]
    %v82 = vmax.f32 %v81, %v80
    %vm83 = vcmask 0
    %84 = vst.msk [vmem:[#allocation2] sm:$0x1] %vm83, %v82
    // Predicated region
    $region14: #{encoder_layer_forward.2} parent=1 // pred_check
      _
    $region15: #{encoder_layer_forward.2} parent=1 // pred_check_branch
      %86 = sbr.rel (0) target = $region17
    $region16: #{encoder_layer_forward.2} parent=1 // pred_region
      %s88 = ssub.s32 16, 16
      %89 = vsyncadd [#allocation3], %s88
      %s91 = sshll.u32 [#allocation2], 4
      %s92 = int_to_ptr.vmem [resolvable:$true] %s91
      %94 = dma.vmem_to_hbm [thread:$0]  %s92, 16, %s2, [#allocation3]
    $region17: #{encoder_layer_forward.2} parent=1 // pred_fallthru
      _
    // Predicated region
    $region18: #{encoder_layer_forward.2} parent=1 // pred_check
      _
    $region19: #{encoder_layer_forward.2} parent=1 // pred_check_branch
      %96 = sbr.rel (0) target = $region21
    $region20: #{encoder_layer_forward.2} parent=1 // pred_region
      %97 = dma.done [#allocation3], 16
    $region21: #{encoder_layer_forward.2} parent=1 // pred_fallthru
      _
    %98 = vsyncpa [#allocation3], 1

// kernel: encoder_layer_forward.3
$region0: #{encoder_layer_forward.3}
  #allocation0 [shape = 'u32[]', space=smem, size = 0x4, offset = 0x4, fixed_abs, tag = 'smem constant byte address 0x4 - core index']
  #allocation1 [shape = 'u32[144,128]{1,0:T(1,128)}', space=vmem, size = 0x12000, scoped, tag = 'internal scratch']
  %s0 = inlined_call_operand.vmem [shape: f32[2,128], index: 0, kind: input, shape index: {}]
  %s1 = inlined_call_operand.vmem [shape: bf16[2,8], index: 1, kind: input, shape index: {}]
  %s2 = inlined_call_operand.vmem [shape: bf16[8,128], index: 2, kind: input, shape index: {}]
  %s3 = inlined_call_operand.vmem [shape: f32[4,128], index: 3, kind: input, shape index: {}]
  %s4 = inlined_call_operand.vmem [shape: f32[3], index: 4, kind: input, shape index: {}]
  %s5 = inlined_call_operand.hbm [shape: f32[2,128], index: 5, kind: output, shape index: {}]
  %s6 = sld [smem:[#allocation0]]
  $region34: #{encoder_layer_forward.3} parent=0
    _
  %s8 = ssub.s32 1, %s6
  %s9 = scalar_select 0, %s8, %s6
  $region1: #{encoder_layer_forward.3} parent=0
    #allocation2 [shape = 'u8[512]{0}', space=smem, size = 0x200, scoped, tag = 'input window, operand 4, single buffered']
    #allocation3 [shape = 's32[1]{0}', space=sflag, size = 0x4, scoped, tag = 'scoped memory for encoder_layer_forward.3']
    #allocation4 [shape = 's32[1]{0}', space=sflag, size = 0x4, scoped, tag = 'scoped memory for encoder_layer_forward.3']
    #allocation5 [shape = 'u8[1024]{0}', space=vmem, size = 0x400, scoped, tag = 'output window, operand 0, single buffered']
    %10 = vsyncpa [#allocation4], 0
    %11 = vsyncpa [#allocation3], 0
    // Predicated region
    $region2: #{encoder_layer_forward.3} parent=1 // pred_check
      _
    $region3: #{encoder_layer_forward.3} parent=1 // pred_check_branch
      %13 = sbr.rel (0) target = $region5
    $region4: #{encoder_layer_forward.3} parent=1 // pred_region
      _
    $region5: #{encoder_layer_forward.3} parent=1 // pred_fallthru
      _
    // Predicated region
    $region6: #{encoder_layer_forward.3} parent=1 // pred_check
      _
    $region7: #{encoder_layer_forward.3} parent=1 // pred_check_branch
      %15 = sbr.rel (0) target = $region9
    $region8: #{encoder_layer_forward.3} parent=1 // pred_region
      _
    $region9: #{encoder_layer_forward.3} parent=1 // pred_fallthru
      _
    // Predicated region
    $region10: #{encoder_layer_forward.3} parent=1 // pred_check
      _
    $region11: #{encoder_layer_forward.3} parent=1 // pred_check_branch
      %17 = sbr.rel (0) target = $region13
    $region12: #{encoder_layer_forward.3} parent=1 // pred_region
      _
    $region13: #{encoder_layer_forward.3} parent=1 // pred_fallthru
      _
    // Predicated region
    $region14: #{encoder_layer_forward.3} parent=1 // pred_check
      _
    $region15: #{encoder_layer_forward.3} parent=1 // pred_check_branch
      %19 = sbr.rel (0) target = $region17
    $region16: #{encoder_layer_forward.3} parent=1 // pred_region
      _
    $region17: #{encoder_layer_forward.3} parent=1 // pred_fallthru
      _
    // Predicated region
    $region18: #{encoder_layer_forward.3} parent=1 // pred_check
      _
    $region19: #{encoder_layer_forward.3} parent=1 // pred_check_branch
      %21 = sbr.rel (0) target = $region21
    $region20: #{encoder_layer_forward.3} parent=1 // pred_region
      %s23 = ssub.s32 16, 16
      %24 = vsyncadd [#allocation4], %s23
      %s26 = sshll.u32 %s4, 4
      %s27 = int_to_ptr.vmem [resolvable:$true] %s26
      %29 = dma.vmem_to_smem %s27, 16, [#allocation2], [#allocation4]
    $region21: #{encoder_layer_forward.3} parent=1 // pred_fallthru
      _
    // Predicated region
    $region22: #{encoder_layer_forward.3} parent=1 // pred_check
      _
    $region23: #{encoder_layer_forward.3} parent=1 // pred_check_branch
      %31 = sbr.rel (0) target = $region25
    $region24: #{encoder_layer_forward.3} parent=1 // pred_region
      %32 = dma.done [#allocation4], 16
    $region25: #{encoder_layer_forward.3} parent=1 // pred_fallthru
      _
    %33 = sfence
    %v35 = vld [vmem:[%s0] sm:$0x3]
    %v36 = vld [vmem:[%s1] sm:$0x1]
    %v37 = vld [vmem:[%s2] sm:$0xf]
    %v38 = vld [vmem:[%s3] sm:$0xf]
    %s39 = sld [smem:[#allocation2]]
    %s40 = sld [smem:[#allocation2 + $0x1]]
    %s41 = sld [smem:[#allocation2 + $0x2]]
    %vm42 = vcmask 64512
    %v44 = vsel %vm42, %v36, 0
    %vm46 = vcmask 1043456
    %v48 = vsel %vm46, %v37, 0
    %50 = vmatprep.subr.bf16.mxu0 0
    %51 = vmatpush1.bf16.msra.mxu0 %v48
    %52 = vmatprep.subr.bf16.mxu0 0
    %53 = vmatpush1.bf16.msra.mxu0 0
    %54 = vmatprep.subr.bf16.mxu0 0
    %55 = vmatpush1.bf16.msra.mxu0 0
    %56 = vmatprep.subr.bf16.mxu0 0
    %57 = vmatpush1.bf16.msra.mxu0 0
    %58 = vmatprep.subr.bf16.mxu0 0
    %59 = vmatpush1.bf16.msra.mxu0 0
    %60 = vmatprep.subr.bf16.mxu0 0
    %61 = vmatpush1.bf16.msra.mxu0 0
    %62 = vmatprep.subr.bf16.mxu0 0
    %63 = vmatpush1.bf16.msra.mxu0 0
    %64 = vmatprep.subr.bf16.mxu0 0
    %65 = vmatpush1.bf16.msra.mxu0 0
    %66 = vmatprep.subr.bf16.mxu0 0
    %67 = vmatpush1.bf16.msra.mxu0 0
    %68 = vmatprep.subr.bf16.mxu0 0
    %69 = vmatpush1.bf16.msra.mxu0 0
    %70 = vmatprep.subr.bf16.mxu0 0
    %71 = vmatpush1.bf16.msra.mxu0 0
    %72 = vmatprep.subr.bf16.mxu0 0
    %73 = vmatpush1.bf16.msra.mxu0 0
    %74 = vmatprep.subr.bf16.mxu0 0
    %75 = vmatpush1.bf16.msra.mxu0 0
    %76 = vmatprep.subr.bf16.mxu0 0
    %77 = vmatpush1.bf16.msra.mxu0 0
    %78 = vmatprep.subr.bf16.mxu0 0
    %79 = vmatpush1.bf16.msra.mxu0 0
    %80 = vmatprep.subr.bf16.mxu0 0
    %81 = vmatpush1.bf16.msra.mxu0 0
    %82 = vmatprep.mubr.bf16.mxu0 0
    %83 = vmatmul.mubr.bf16.gmra.mrb[0].mxu0 %v44
    %v84 = vpop.f32.mrb[0].mxu0
    %v85 = vadd.f32 0.0, %v84
    %v86 = vpop.f32.mrb[0].mxu0
    %v87 = vpop.f32.mrb[0].mxu0
    %v88 = vpop.f32.mrb[0].mxu0
    %89 = vdwg.mxu0
    %v90 = vunpack.c.l.bf16 %v36
    %v91 = vsub.f32 %v90, 1.0
    %v92 = vand.u32 2147483647, %v91
    %vm93 = vcmask 58368
    %v94 = vsel %vm93, %v92, -inf
    %95 = vmax.xlane.f32.xlu0 %v94
    %v96 = vpop.xlane.xlu0 %95
    %vm97 = vcmp.gt.f32.partialorder %v96, 0.0
    %v98 = vstv %s41
    %v99 = vsel %vm97, %v98, 0.0
    %v100 = vand.u32 2147483647, %v35
    %v101 = vlaneseq
    %v102 = vshrl.u32 %v101, 7
    %v103 = vsub.s32 0, %v102
    %v104 = vrot.slane %v38, %v103
    %v105 = vmul.f32 %v100, %v104
    %v106 = vtanh.pop %v105
    %v107 = vlaneseq
    %v108 = vshrl.u32 %v107, 7
    %v109 = vsub.s32 1, %v108
    %v110 = vrot.slane %v38, %v109
    %v111 = vmul.f32 %v100, %v110
    %v112 = vtanh.pop %v111
    %v113 = vstv %s39
    %v114 = vmul.f32 %v85, %v113
    %v115 = vadd.f32 %v114, %v106
    %v116 = vadd.f32 %v112, 0.5
    %v117 = vmul.f32 %v115, %v116
    %v118 = vlaneseq
    %v119 = vshrl.u32 %v118, 7
    %v120 = vsub.s32 2, %v119
    %v121 = vrot.slane %v38, %v120
    %v122 = vmul.f32 %v121, %v99
    %v123 = vmul.f32 %v117, %v122
    %v124 = vstv %s40
    %v125 = vadd.f32 %v123, %v124
    %v126 = vlaneseq
    %v127 = vshrl.u32 %v126, 7
    %v128 = vsub.s32 3, %v127
    %v129 = vrot.slane %v38, %v128
    %v130 = vadd.f32 %v125, %v129
    %vm131 = vcmask 1041408
    %v132 = vsel %vm131, %v130, -inf
    %133 = vmax.xlane.f32.xlu0 %v132
    %v134 = vpop.xlane.xlu0 %133
    %v135 = vsub.f32 %v130, %v134
    %v136 = vmul.f32 %v135, 1.442695
    %v137 = vpow.pop %v136
    %v138 = vsel %vm131, %v137, 0.0
    %139 = vadd.xlane.f32.xlu0 %v138
    %v140 = vpop.xlane.xlu0 %139
    %v141 = vrcp.pop %v140
    %v142 = vmul.f32 %v137, %v141
    %143 = vst [vmem:[#allocation5] sm:$0x3] %v142
    // Predicated region
    $region26: #{encoder_layer_forward.3} parent=1 // pred_check
      _
    $region27: #{encoder_layer_forward.3} parent=1 // pred_check_branch
      %145 = sbr.rel (0) target = $region29
    $region28: #{encoder_layer_forward.3} parent=1 // pred_region
      %s147 = ssub.s32 32, 32
      %148 = vsyncadd [#allocation3], %s147
      %s150 = sshll.u32 [#allocation5], 4
      %s151 = int_to_ptr.vmem [resolvable:$true] %s150
      %153 = dma.vmem_to_hbm [thread:$0]  %s151, 32, %s5, [#allocation3]
    $region29: #{encoder_layer_forward.3} parent=1 // pred_fallthru
      _
    // Predicated region
    $region30: #{encoder_layer_forward.3} parent=1 // pred_check
      _
    $region31: #{encoder_layer_forward.3} parent=1 // pred_check_branch
      %155 = sbr.rel (0) target = $region33
    $region32: #{encoder_layer_forward.3} parent=1 // pred_region
      %156 = dma.done [#allocation3], 32
    $region33: #{encoder_layer_forward.3} parent=1 // pred_fallthru
      _
    %157 = vsyncpa [#allocation3], 1
    %158 = vsyncpa [#allocation4], 1

</llo_original>
